<compile_context>
chip_gen: v7x
topology: tpu7x:2x2x1
jax: 0.10.0
libtpu: 0.0.40
codegen_flags: <defaults>
</compile_context>

<pallas_src>
import functools

import jax
import jax.numpy as jnp
from jax.experimental import pallas as pl
from jax.experimental.pallas import tpu as pltpu

MAX_BATCH_TILE = 4096  # [inlen+4, 4096] bf16 tile ~64 KiB: tiny on every gen.


def neteq_kernel(xc_ref, w1_ref, b1_ref, w2_ref, b2_ref, w3_ref, b3_ref,
                 w4_ref, b4_ref, o_ref, *, act_dtype):
    """One batch tile; activations are [F, TB] with the batch on the lane axis.

    act_dtype: dtype used for the hidden-layer bias-add / tanh elementwise math
    (bf16 on v6e/v7x which have bf16 VPU/EUP, f32 on v5e and older).
    """
    bf16 = jnp.bfloat16
    f32 = jnp.float32

    # fc1: fused-concat input (p2/50 already folded into w1) -> single MXU dot.
    h = jnp.dot(w1_ref[...], xc_ref[...], preferred_element_type=f32)  # [18, TB]
    h = jnp.tanh(h.astype(act_dtype) + b1_ref[...])

    # fc2 / fc3: matmul (bf16 MXU, f32 acc) + bias + tanh.
    h = jnp.dot(w2_ref[...], h.astype(bf16), preferred_element_type=f32)
    h = jnp.tanh(h.astype(act_dtype) + b2_ref[...])

    h = jnp.dot(w3_ref[...], h.astype(bf16), preferred_element_type=f32)
    h = jnp.tanh(h.astype(act_dtype) + b3_ref[...])

    # fc4: final linear, f32 output.
    o_ref[...] = (jnp.dot(w4_ref[...], h.astype(bf16),
                          preferred_element_type=f32) + b4_ref[...])


def init_params(key, inlen):
    """PyTorch nn.Linear-style init: weight [out, in], bias [out]."""
    dims = [(inlen + 4, 18), (18, 18), (18, 18), (18, 1)]
    ws, bs = [], []
    for i, (fi, fo) in enumerate(dims):
        kw, kb = jax.random.split(jax.random.fold_in(key, i))
        bound = 1.0 / float(fi) ** 0.5
        ws.append(jax.random.uniform(kw, (fo, fi), jnp.float32, -bound, bound))
        bs.append(jax.random.uniform(kb, (fo,), jnp.float32, -bound, bound))
    return ws, bs


def prep_params(ws, bs, inlen, act_dtype):
    """Cast params for the kernel; fold the p2/50 scale into the W1 column."""
    w1, w2, w3, w4 = ws
    b1, b2, b3, b4 = bs
    w1 = w1.at[:, inlen + 1].multiply(1.0 / 50.0)    # p2 / 50 -> weight column
    return dict(
        w1=w1.astype(jnp.bfloat16),                  # [18, inlen+4] (MXU)
        b1=b1.reshape(-1, 1).astype(act_dtype),      # [18, 1]
        w2=w2.astype(jnp.bfloat16),                  # [18, 18]
        b2=b2.reshape(-1, 1).astype(act_dtype),
        w3=w3.astype(jnp.bfloat16),                  # [18, 18]
        b3=b3.reshape(-1, 1).astype(act_dtype),
        w4=w4.astype(jnp.bfloat16),                  # [1, 18]
        b4=b4.reshape(-1, 1).astype(jnp.float32),    # [1, 1] (f32 output)
    )


def pick_act_dtype():
    """bf16 elementwise math only where the VPU/EUP are bf16-native."""
    try:
        kind = jax.devices()[0].device_kind.lower()
    except Exception:
        return jnp.float32
    if "v6" in kind or "v7" in kind:
        return jnp.bfloat16
    return jnp.float32  # v5e and older: f32-only VPU/EUP


def _round_up(v, m):
    return ((v + m - 1) // m) * m


def _pick_batch_tile(B):
    """>=2 lane-dense grid steps when B permits (TC sharding + DMA overlap)."""
    if B <= 512:
        return B  # single block; block last dim == full array dim is legal
    return min(MAX_BATCH_TILE, _round_up(pl.cdiv(B, 2), 128))


def neteq_forward(x, p1, p2, p3, p4, params, act_dtype=jnp.float32):
    """Matches neteq.forward: x [B, inlen], p* [B, 1] -> [B, 1, 1]."""
    B, inlen = x.shape
    f_in = inlen + 4

    # Fused concat, feature-major (batch-on-lanes), bf16 stream.
    # Raw p2 is concatenated; the /50 lives in the W1 column.
    xc = jnp.concatenate([x, p1, p2, p3, p4], axis=1)        # [B, f_in]
    xcT = jnp.transpose(xc).astype(jnp.bfloat16)             # [f_in, B]

    tb = _pick_batch_tile(B)
    grid = (pl.cdiv(B, tb),)

    consts = [params[k] for k in
              ("w1", "b1", "w2", "b2", "w3", "b3", "w4", "b4")]

    def resident(a):  # full array, VMEM-resident across all grid steps
        return pl.BlockSpec(a.shape, lambda i: (0, 0))

    cost = pl.CostEstimate(
        flops=2 * B * (f_in * 18 + 18 * 18 + 18 * 18 + 18),
        transcendentals=3 * 18 * B,
        bytes_accessed=2 * B * f_in + 4 * B
        + sum(int(a.size) * a.dtype.itemsize for a in consts),
    )

    kernel = functools.partial(neteq_kernel, act_dtype=act_dtype)

    out = pl.pallas_call(
        kernel,
        grid=grid,
        out_shape=jax.ShapeDtypeStruct((1, B), jnp.float32),
        in_specs=[pl.BlockSpec((f_in, tb), lambda i: (0, i))]
                 + [resident(a) for a in consts],
        out_specs=pl.BlockSpec((1, tb), lambda i: (0, i)),
        compiler_params=pltpu.CompilerParams(
            dimension_semantics=("parallel",)),
        cost_estimate=cost,
    )(xcT, *consts)

    # out5.unsqueeze(dim=1): [1, B] -> [B, 1, 1]
    return out.reshape(B, 1, 1)


def _ref_matched(x, p1, p2, p3, p4, pp, act_dtype):
    """Plain-JAX reference with the same dtype strategy as the kernel."""
    bf16, f32 = jnp.bfloat16, jnp.float32
    xc = jnp.concatenate([x, p1, p2, p3, p4], axis=1).T.astype(bf16)
    h = jnp.dot(pp["w1"], xc, preferred_element_type=f32)
    h = jnp.tanh(h.astype(act_dtype) + pp["b1"])
    h = jnp.dot(pp["w2"], h.astype(bf16), preferred_element_type=f32)
    h = jnp.tanh(h.astype(act_dtype) + pp["b2"])
    h = jnp.dot(pp["w3"], h.astype(bf16), preferred_element_type=f32)
    h = jnp.tanh(h.astype(act_dtype) + pp["b3"])
    o = jnp.dot(pp["w4"], h.astype(bf16), preferred_element_type=f32) + pp["b4"]
    return o.reshape(-1, 1, 1)


def _ref_f32(x, p1, p2, p3, p4, ws, bs):
    """PyTorch-faithful full-f32 reference."""
    xc = jnp.concatenate([x, p1, p2 / 50.0, p3, p4], axis=1)
    h = jnp.tanh(xc @ ws[0].T + bs[0])
    h = jnp.tanh(h @ ws[1].T + bs[1])
    h = jnp.tanh(h @ ws[2].T + bs[2])
    return (h @ ws[3].T + bs[3])[:, None, :]


def _run_case(B, inlen, ws, bs, params, act_dtype, fwd, key):
    kx, k1, k2, k3, k4 = jax.random.split(key, 5)
    x = jax.random.normal(kx, (B, inlen), jnp.float32)
    p1 = jax.random.normal(k1, (B, 1), jnp.float32)
    p2 = jax.random.normal(k2, (B, 1), jnp.float32) * 50.0
    p3 = jax.random.normal(k3, (B, 1), jnp.float32)
    p4 = jax.random.normal(k4, (B, 1), jnp.float32)

    out = jax.block_until_ready(fwd(x, p1, p2, p3, p4, params))
    assert out.shape == (B, 1, 1), out.shape

    ref1 = _ref_matched(x, p1, p2, p3, p4, params, act_dtype)
    assert jnp.allclose(out, ref1, atol=1e-2, rtol=1e-2), \
        ("matched ref mismatch", float(jnp.max(jnp.abs(out - ref1))))

    ref2 = _ref_f32(x, p1, p2, p3, p4, ws, bs)
    assert jnp.allclose(out, ref2, atol=5e-2, rtol=5e-2), \
        ("f32 ref mismatch", float(jnp.max(jnp.abs(out - ref2))))


if __name__ == "__main__":
    key = jax.random.PRNGKey(0)
    inlen = 4      # x feature length

    act_dtype = pick_act_dtype()
    ws, bs = init_params(jax.random.fold_in(key, 1000), inlen)
    params = prep_params(ws, bs, inlen, act_dtype)

    fwd = jax.jit(functools.partial(neteq_forward, act_dtype=act_dtype))

    # Small-batch case (single grid step, block == full batch).
    _run_case(8, inlen, ws, bs, params, act_dtype, fwd, jax.random.fold_in(key, 0))

    # Partial-last-block case: B not a multiple of the 384-lane tile or of 128,
    # exercising the masked writeback path (padded lanes are discarded).
    _run_case(700, inlen, ws, bs, params, act_dtype, fwd, jax.random.fold_in(key, 1))

    print("KERNEL_OK")
</pallas_src>

<mosaic_0001>
module attributes {stable_mosaic.version = 11 : i64} {
  func.func @neteq_kernel(%arg0: i32, %arg1: memref<8x8xbf16, #tpu.memory_space<vmem>>, %arg2: memref<18x8xbf16, #tpu.memory_space<vmem>>, %arg3: memref<18x1xf32, #tpu.memory_space<vmem>>, %arg4: memref<18x18xbf16, #tpu.memory_space<vmem>>, %arg5: memref<18x1xf32, #tpu.memory_space<vmem>>, %arg6: memref<18x18xbf16, #tpu.memory_space<vmem>>, %arg7: memref<18x1xf32, #tpu.memory_space<vmem>>, %arg8: memref<1x18xbf16, #tpu.memory_space<vmem>>, %arg9: memref<1x1xf32, #tpu.memory_space<vmem>>, %arg10: memref<1x8xf32, #tpu.memory_space<vmem>>) attributes {dimension_semantics = [#tpu.dimension_semantics<parallel>], iteration_bounds = array<i64: 1>, scalar_prefetch = 0 : i64, scratch_operands = 0 : i64, tpu.core_type = #tpu.core_type<tc>, window_params = [{transform_indices = @transform_0, window_bounds = array<i64: 8, 8>}, {pipeline_mode = #tpu.pipeline_mode<synchronous>, transform_indices = @transform_1, window_bounds = array<i64: 18, 8>}, {pipeline_mode = #tpu.pipeline_mode<synchronous>, transform_indices = @transform_2, window_bounds = array<i64: 18, 1>}, {pipeline_mode = #tpu.pipeline_mode<synchronous>, transform_indices = @transform_3, window_bounds = array<i64: 18, 18>}, {pipeline_mode = #tpu.pipeline_mode<synchronous>, transform_indices = @transform_4, window_bounds = array<i64: 18, 1>}, {pipeline_mode = #tpu.pipeline_mode<synchronous>, transform_indices = @transform_5, window_bounds = array<i64: 18, 18>}, {pipeline_mode = #tpu.pipeline_mode<synchronous>, transform_indices = @transform_6, window_bounds = array<i64: 18, 1>}, {pipeline_mode = #tpu.pipeline_mode<synchronous>, transform_indices = @transform_7, window_bounds = array<i64: 1, 18>}, {pipeline_mode = #tpu.pipeline_mode<synchronous>, transform_indices = @transform_8, window_bounds = array<i64: 1, 1>}, {transform_indices = @transform_9, window_bounds = array<i64: 1, 8>}]} {
    %c0 = arith.constant 0 : index
    %c0_0 = arith.constant 0 : index
    %0 = vector.load %arg2[%c0, %c0_0] : memref<18x8xbf16, #tpu.memory_space<vmem>>, vector<18x8xbf16>
    %c0_1 = arith.constant 0 : index
    %c0_2 = arith.constant 0 : index
    %1 = vector.load %arg1[%c0_1, %c0_2] : memref<8x8xbf16, #tpu.memory_space<vmem>>, vector<8x8xbf16>
    %cst = arith.constant dense<0.000000e+00> : vector<18x8xf32>
    %2 = tpu.matmul %0, %1, %cst {dimension_numbers = #tpu.dot_dimension_numbers<[1], [0], [0], [1], [0, 0, 1, 1], [], []>} : vector<18x8xbf16>, vector<8x8xbf16>, vector<18x8xf32> -> vector<18x8xf32>
    %c0_3 = arith.constant 0 : index
    %c0_4 = arith.constant 0 : index
    %3 = vector.load %arg3[%c0_3, %c0_4] : memref<18x1xf32, #tpu.memory_space<vmem>>, vector<18x1xf32>
    %4 = vector.broadcast %3 : vector<18x1xf32> to vector<18x8xf32>
    %5 = arith.addf %2, %4 : vector<18x8xf32>
    %6 = math.tanh %5 : vector<18x8xf32>
    %c0_5 = arith.constant 0 : index
    %c0_6 = arith.constant 0 : index
    %7 = vector.load %arg4[%c0_5, %c0_6] : memref<18x18xbf16, #tpu.memory_space<vmem>>, vector<18x18xbf16>
    %8 = arith.truncf %6 : vector<18x8xf32> to vector<18x8xbf16>
    %cst_7 = arith.constant dense<0.000000e+00> : vector<18x8xf32>
    %9 = tpu.matmul %7, %8, %cst_7 {dimension_numbers = #tpu.dot_dimension_numbers<[1], [0], [0], [1], [0, 0, 1, 1], [], []>} : vector<18x18xbf16>, vector<18x8xbf16>, vector<18x8xf32> -> vector<18x8xf32>
    %c0_8 = arith.constant 0 : index
    %c0_9 = arith.constant 0 : index
    %10 = vector.load %arg5[%c0_8, %c0_9] : memref<18x1xf32, #tpu.memory_space<vmem>>, vector<18x1xf32>
    %11 = vector.broadcast %10 : vector<18x1xf32> to vector<18x8xf32>
    %12 = arith.addf %9, %11 : vector<18x8xf32>
    %13 = math.tanh %12 : vector<18x8xf32>
    %c0_10 = arith.constant 0 : index
    %c0_11 = arith.constant 0 : index
    %14 = vector.load %arg6[%c0_10, %c0_11] : memref<18x18xbf16, #tpu.memory_space<vmem>>, vector<18x18xbf16>
    %15 = arith.truncf %13 : vector<18x8xf32> to vector<18x8xbf16>
    %cst_12 = arith.constant dense<0.000000e+00> : vector<18x8xf32>
    %16 = tpu.matmul %14, %15, %cst_12 {dimension_numbers = #tpu.dot_dimension_numbers<[1], [0], [0], [1], [0, 0, 1, 1], [], []>} : vector<18x18xbf16>, vector<18x8xbf16>, vector<18x8xf32> -> vector<18x8xf32>
    %c0_13 = arith.constant 0 : index
    %c0_14 = arith.constant 0 : index
    %17 = vector.load %arg7[%c0_13, %c0_14] : memref<18x1xf32, #tpu.memory_space<vmem>>, vector<18x1xf32>
    %18 = vector.broadcast %17 : vector<18x1xf32> to vector<18x8xf32>
    %19 = arith.addf %16, %18 : vector<18x8xf32>
    %20 = math.tanh %19 : vector<18x8xf32>
    %c0_15 = arith.constant 0 : index
    %c0_16 = arith.constant 0 : index
    %21 = vector.load %arg8[%c0_15, %c0_16] : memref<1x18xbf16, #tpu.memory_space<vmem>>, vector<1x18xbf16>
    %22 = arith.truncf %20 : vector<18x8xf32> to vector<18x8xbf16>
    %cst_17 = arith.constant dense<0.000000e+00> : vector<1x8xf32>
    %23 = tpu.matmul %21, %22, %cst_17 {dimension_numbers = #tpu.dot_dimension_numbers<[1], [0], [0], [1], [0, 0, 1, 1], [], []>} : vector<1x18xbf16>, vector<18x8xbf16>, vector<1x8xf32> -> vector<1x8xf32>
    %c0_18 = arith.constant 0 : index
    %c0_19 = arith.constant 0 : index
    %24 = vector.load %arg9[%c0_18, %c0_19] : memref<1x1xf32, #tpu.memory_space<vmem>>, vector<1x1xf32>
    %25 = vector.broadcast %24 : vector<1x1xf32> to vector<1x8xf32>
    %26 = arith.addf %23, %25 : vector<1x8xf32>
    %c0_20 = arith.constant 0 : index
    %c0_21 = arith.constant 0 : index
    %27 = vector.load %arg10[%c0_20, %c0_21] : memref<1x8xf32, #tpu.memory_space<vmem>>, vector<1x8xf32>
    tpu.vector_store %arg10[%c0_20, %c0_21], %26 {strides = array<i32>} : memref<1x8xf32, #tpu.memory_space<vmem>>, vector<1x8xf32>,
    return
  }
  func.func @transform_0(%arg0: i32) -> (i32, i32) {
    %c0_i32 = arith.constant 0 : i32
    %c0_i32_0 = arith.constant 0 : i32
    return %c0_i32, %arg0 : i32, i32
  }
  func.func @transform_1(%arg0: i32) -> (i32, i32) {
    %c0_i32 = arith.constant 0 : i32
    %c0_i32_0 = arith.constant 0 : i32
    %c0_i32_1 = arith.constant 0 : i32
    return %c0_i32, %c0_i32_0 : i32, i32
  }
  func.func @transform_2(%arg0: i32) -> (i32, i32) {
    %c0_i32 = arith.constant 0 : i32
    %c0_i32_0 = arith.constant 0 : i32
    %c0_i32_1 = arith.constant 0 : i32
    return %c0_i32, %c0_i32_0 : i32, i32
  }
  func.func @transform_3(%arg0: i32) -> (i32, i32) {
    %c0_i32 = arith.constant 0 : i32
    %c0_i32_0 = arith.constant 0 : i32
    %c0_i32_1 = arith.constant 0 : i32
    return %c0_i32, %c0_i32_0 : i32, i32
  }
  func.func @transform_4(%arg0: i32) -> (i32, i32) {
    %c0_i32 = arith.constant 0 : i32
    %c0_i32_0 = arith.constant 0 : i32
    %c0_i32_1 = arith.constant 0 : i32
    return %c0_i32, %c0_i32_0 : i32, i32
  }
  func.func @transform_5(%arg0: i32) -> (i32, i32) {
    %c0_i32 = arith.constant 0 : i32
    %c0_i32_0 = arith.constant 0 : i32
    %c0_i32_1 = arith.constant 0 : i32
    return %c0_i32, %c0_i32_0 : i32, i32
  }
  func.func @transform_6(%arg0: i32) -> (i32, i32) {
    %c0_i32 = arith.constant 0 : i32
    %c0_i32_0 = arith.constant 0 : i32
    %c0_i32_1 = arith.constant 0 : i32
    return %c0_i32, %c0_i32_0 : i32, i32
  }
  func.func @transform_7(%arg0: i32) -> (i32, i32) {
    %c0_i32 = arith.constant 0 : i32
    %c0_i32_0 = arith.constant 0 : i32
    %c0_i32_1 = arith.constant 0 : i32
    return %c0_i32, %c0_i32_0 : i32, i32
  }
  func.func @transform_8(%arg0: i32) -> (i32, i32) {
    %c0_i32 = arith.constant 0 : i32
    %c0_i32_0 = arith.constant 0 : i32
    %c0_i32_1 = arith.constant 0 : i32
    return %c0_i32, %c0_i32_0 : i32, i32
  }
  func.func @transform_9(%arg0: i32) -> (i32, i32) {
    %c0_i32 = arith.constant 0 : i32
    %c0_i32_0 = arith.constant 0 : i32
    return %c0_i32, %arg0 : i32, i32
  }
}

</mosaic_0001>

<llo_original>
// kernel: neteq_forward.1
$region0: #{neteq_forward.1}
  #allocation0 [shape = 'u32[]', space=smem, size = 0x4, offset = 0x4, fixed_abs, tag = 'smem constant byte address 0x4 - core index']
  #allocation1 [shape = 'u32[144,128]{1,0:T(1,128)}', space=vmem, size = 0x12000, scoped, tag = 'internal scratch']
  #allocation2 [shape = 'f32[1,1]{1,0:T(1,128)S(1)}', space=vmem, size = 0x200, scoped, tag = 'scoped memory for neteq_forward.1']
  %s0 = inlined_call_operand.vmem [shape: bf16[8,8], index: 0, kind: input, shape index: {}]
  %s1 = inlined_call_operand.vmem [shape: bf16[18,8], index: 1, kind: input, shape index: {}]
  %s2 = inlined_call_operand.vmem [shape: f32[18,1], index: 2, kind: input, shape index: {}]
  %s3 = inlined_call_operand.vmem [shape: bf16[18,18], index: 3, kind: input, shape index: {}]
  %s4 = inlined_call_operand.vmem [shape: f32[18,1], index: 4, kind: input, shape index: {}]
  %s5 = inlined_call_operand.vmem [shape: bf16[18,18], index: 5, kind: input, shape index: {}]
  %s6 = inlined_call_operand.vmem [shape: f32[18,1], index: 6, kind: input, shape index: {}]
  %s7 = inlined_call_operand.vmem [shape: bf16[1,18], index: 7, kind: input, shape index: {}]
  %s8 = inlined_call_operand.<no memory space> [shape: f32[1,1], index: 8, kind: input, shape index: {}]
  %s9 = inlined_call_operand.hbm [shape: f32[1,8], index: 9, kind: output, shape index: {}]
  %s10 = sld [smem:[#allocation0]]
  $region46: #{neteq_forward.1} parent=0
    _
  %s12 = ssub.s32 1, %s10
  %s13 = scalar_select 0, %s12, %s10
  %v14 = vstv %s8
  %15 = vst [vmem:[#allocation2] sm:$0x1] %v14
  $region1: #{neteq_forward.1} parent=0
    #allocation3 [shape = 'u8[512]{0}', space=vmem, size = 0x400, scoped, tag = 'output window, operand 0, single buffered']
    #allocation4 [shape = 's32[1]{0}', space=sflag, size = 0x4, scoped, tag = 'scoped memory for neteq_forward.1']
    %16 = vsyncpa [#allocation4], 0
    // Predicated region
    $region2: #{neteq_forward.1} parent=1 // pred_check
      _
    $region3: #{neteq_forward.1} parent=1 // pred_check_branch
      %18 = sbr.rel (0) target = $region5
    $region4: #{neteq_forward.1} parent=1 // pred_region
      _
    $region5: #{neteq_forward.1} parent=1 // pred_fallthru
      _
    // Predicated region
    $region6: #{neteq_forward.1} parent=1 // pred_check
      _
    $region7: #{neteq_forward.1} parent=1 // pred_check_branch
      %20 = sbr.rel (0) target = $region9
    $region8: #{neteq_forward.1} parent=1 // pred_region
      _
    $region9: #{neteq_forward.1} parent=1 // pred_fallthru
      _
    // Predicated region
    $region10: #{neteq_forward.1} parent=1 // pred_check
      _
    $region11: #{neteq_forward.1} parent=1 // pred_check_branch
      %22 = sbr.rel (0) target = $region13
    $region12: #{neteq_forward.1} parent=1 // pred_region
      _
    $region13: #{neteq_forward.1} parent=1 // pred_fallthru
      _
    // Predicated region
    $region14: #{neteq_forward.1} parent=1 // pred_check
      _
    $region15: #{neteq_forward.1} parent=1 // pred_check_branch
      %24 = sbr.rel (0) target = $region17
    $region16: #{neteq_forward.1} parent=1 // pred_region
      _
    $region17: #{neteq_forward.1} parent=1 // pred_fallthru
      _
    // Predicated region
    $region18: #{neteq_forward.1} parent=1 // pred_check
      _
    $region19: #{neteq_forward.1} parent=1 // pred_check_branch
      %26 = sbr.rel (0) target = $region21
    $region20: #{neteq_forward.1} parent=1 // pred_region
      _
    $region21: #{neteq_forward.1} parent=1 // pred_fallthru
      _
    // Predicated region
    $region22: #{neteq_forward.1} parent=1 // pred_check
      _
    $region23: #{neteq_forward.1} parent=1 // pred_check_branch
      %28 = sbr.rel (0) target = $region25
    $region24: #{neteq_forward.1} parent=1 // pred_region
      _
    $region25: #{neteq_forward.1} parent=1 // pred_fallthru
      _
    // Predicated region
    $region26: #{neteq_forward.1} parent=1 // pred_check
      _
    $region27: #{neteq_forward.1} parent=1 // pred_check_branch
      %30 = sbr.rel (0) target = $region29
    $region28: #{neteq_forward.1} parent=1 // pred_region
      _
    $region29: #{neteq_forward.1} parent=1 // pred_fallthru
      _
    // Predicated region
    $region30: #{neteq_forward.1} parent=1 // pred_check
      _
    $region31: #{neteq_forward.1} parent=1 // pred_check_branch
      %32 = sbr.rel (0) target = $region33
    $region32: #{neteq_forward.1} parent=1 // pred_region
      _
    $region33: #{neteq_forward.1} parent=1 // pred_fallthru
      _
    // Predicated region
    $region34: #{neteq_forward.1} parent=1 // pred_check
      _
    $region35: #{neteq_forward.1} parent=1 // pred_check_branch
      %34 = sbr.rel (0) target = $region37
    $region36: #{neteq_forward.1} parent=1 // pred_region
      _
    $region37: #{neteq_forward.1} parent=1 // pred_fallthru
      _
    %v36 = vld [vmem:[%s1] sm:$0xf]
    %v37 = vld [vmem:[%s1 + $0x4] sm:$0xf]
    %v38 = vld [vmem:[%s1 + $0x8] sm:$0x1]
    %v39 = vld [vmem:[%s0] sm:$0xf]
    %v40 = vld [vmem:[%s2] sm:$0xff]
    %v41 = vld [vmem:[%s2 + $0x8] sm:$0xff]
    %v42 = vld [vmem:[%s2 + $0x10] sm:$0x3]
    %44 = vset.pattern.permute.xlu0 0
    %45 = vperm.xlu0 %44, %v40
    %v46 = vpop.permute.xlu0 %45
    %49 = vset.pattern.permute.xlu0 0
    %50 = vperm.xlu0 %49, %v41
    %v51 = vpop.permute.xlu0 %50
    %54 = vset.pattern.permute.xlu0 0
    %55 = vperm.xlu0 %54, %v42
    %v56 = vpop.permute.xlu0 %55
    %v61 = vunpack.c.l.b16 %v36
    %v62 = vunpack.c.l.b16 %v37
    %v63 = vunpack.c.l.b16 %v38
    %v64 = vpack.c.b16 %v62, %v61
    %v65 = vpack.c.b16 %v63, %v63
    %vm66 = vcmask 64512
    %v68 = vsel %vm66, %v64, 0
    %v71 = vsel %vm66, %v65, 0
    %vm73 = vcmask 1043456
    %v75 = vsel %vm73, %v39, 0
    %77 = vmatprep.subr.bf16.mxu0 0
    %78 = vmatpush1.bf16.msra.mxu0 %v75
    %79 = vmatprep.subr.bf16.mxu0 0
    %80 = vmatpush1.bf16.msra.mxu0 0
    %81 = vmatprep.subr.bf16.mxu0 0
    %82 = vmatpush1.bf16.msra.mxu0 0
    %83 = vmatprep.subr.bf16.mxu0 0
    %84 = vmatpush1.bf16.msra.mxu0 0
    %85 = vmatprep.subr.bf16.mxu0 0
    %86 = vmatpush1.bf16.msra.mxu0 0
    %87 = vmatprep.subr.bf16.mxu0 0
    %88 = vmatpush1.bf16.msra.mxu0 0
    %89 = vmatprep.subr.bf16.mxu0 0
    %90 = vmatpush1.bf16.msra.mxu0 0
    %91 = vmatprep.subr.bf16.mxu0 0
    %92 = vmatpush1.bf16.msra.mxu0 0
    %93 = vmatprep.subr.bf16.mxu0 0
    %94 = vmatpush1.bf16.msra.mxu0 0
    %95 = vmatprep.subr.bf16.mxu0 0
    %96 = vmatpush1.bf16.msra.mxu0 0
    %97 = vmatprep.subr.bf16.mxu0 0
    %98 = vmatpush1.bf16.msra.mxu0 0
    %99 = vmatprep.subr.bf16.mxu0 0
    %100 = vmatpush1.bf16.msra.mxu0 0
    %101 = vmatprep.subr.bf16.mxu0 0
    %102 = vmatpush1.bf16.msra.mxu0 0
    %103 = vmatprep.subr.bf16.mxu0 0
    %104 = vmatpush1.bf16.msra.mxu0 0
    %105 = vmatprep.subr.bf16.mxu0 0
    %106 = vmatpush1.bf16.msra.mxu0 0
    %107 = vmatprep.subr.bf16.mxu0 0
    %108 = vmatpush1.bf16.msra.mxu0 0
    %109 = vmatprep.mubr.bf16.mxu0 0
    %110 = vmatmul.mubr.bf16.gmra.mrb[0].mxu0 %v68
    %v111 = vpop.f32.mrb[0].mxu0
    %v112 = vadd.f32 %v46, %v111
    %v113 = vpop.f32.mrb[0].mxu0
    %v114 = vpop.f32.mrb[0].mxu0
    %v115 = vadd.f32 %v51, %v114
    %v116 = vpop.f32.mrb[0].mxu0
    %117 = vmatprep.mubr.bf16.mxu0 0
    %118 = vmatmul.mubr.bf16.gmra.mrb[0].mxu0 %v71
    %v119 = vpop.f32.mrb[0].mxu0
    %v120 = vadd.f32 %v56, %v119
    %v121 = vpop.f32.mrb[0].mxu0
    %v122 = vpop.f32.mrb[0].mxu0
    %v123 = vpop.f32.mrb[0].mxu0
    %124 = vdwg.mxu0
    %v125 = vtanh.pop %v112
    %v126 = vtanh.pop %v115
    %v127 = vtanh.pop %v120
    %v128 = vld [vmem:[%s3] sm:$0xf]
    %v129 = vld [vmem:[%s3 + $0x4] sm:$0xf]
    %v130 = vld [vmem:[%s3 + $0x8] sm:$0x1]
    %v131 = vpack.c.bf16 %v126, %v125
    %v132 = vpack.c.bf16 %v127, %v127
    %v133 = vld [vmem:[%s4] sm:$0xff]
    %v134 = vld [vmem:[%s4 + $0x8] sm:$0xff]
    %v135 = vld [vmem:[%s4 + $0x10] sm:$0x3]
    %137 = vset.pattern.permute.xlu0 0
    %138 = vperm.xlu0 %137, %v133
    %v139 = vpop.permute.xlu0 %138
    %142 = vset.pattern.permute.xlu0 0
    %143 = vperm.xlu0 %142, %v134
    %v144 = vpop.permute.xlu0 %143
    %147 = vset.pattern.permute.xlu0 0
    %148 = vperm.xlu0 %147, %v135
    %v149 = vpop.permute.xlu0 %148
    %v154 = vunpack.c.l.b16 %v128
    %v155 = vunpack.c.l.b16 %v129
    %v156 = vunpack.c.l.b16 %v130
    %v157 = vpack.c.b16 %v155, %v154
    %v158 = vpack.c.b16 %v156, %v156
    %vm159 = vcmask 146432
    %v161 = vsel %vm159, %v157, 0
    %v164 = vsel %vm159, %v158, 0
    %vm166 = vcmask 1040384
    %v168 = vsel %vm166, %v132, 0
    %170 = vmatprep.subr.bf16.mxu0 0
    %171 = vmatpush1.bf16.msra.mxu0 %v131
    %172 = vmatprep.subr.bf16.mxu0 0
    %173 = vmatpush1.bf16.msra.mxu0 %v168
    %174 = vmatprep.subr.bf16.mxu0 0
    %175 = vmatpush1.bf16.msra.mxu0 0
    %176 = vmatprep.subr.bf16.mxu0 0
    %177 = vmatpush1.bf16.msra.mxu0 0
    %178 = vmatprep.subr.bf16.mxu0 0
    %179 = vmatpush1.bf16.msra.mxu0 0
    %180 = vmatprep.subr.bf16.mxu0 0
    %181 = vmatpush1.bf16.msra.mxu0 0
    %182 = vmatprep.subr.bf16.mxu0 0
    %183 = vmatpush1.bf16.msra.mxu0 0
    %184 = vmatprep.subr.bf16.mxu0 0
    %185 = vmatpush1.bf16.msra.mxu0 0
    %186 = vmatprep.subr.bf16.mxu0 0
    %187 = vmatpush1.bf16.msra.mxu0 0
    %188 = vmatprep.subr.bf16.mxu0 0
    %189 = vmatpush1.bf16.msra.mxu0 0
    %190 = vmatprep.subr.bf16.mxu0 0
    %191 = vmatpush1.bf16.msra.mxu0 0
    %192 = vmatprep.subr.bf16.mxu0 0
    %193 = vmatpush1.bf16.msra.mxu0 0
    %194 = vmatprep.subr.bf16.mxu0 0
    %195 = vmatpush1.bf16.msra.mxu0 0
    %196 = vmatprep.subr.bf16.mxu0 0
    %197 = vmatpush1.bf16.msra.mxu0 0
    %198 = vmatprep.subr.bf16.mxu0 0
    %199 = vmatpush1.bf16.msra.mxu0 0
    %200 = vmatprep.subr.bf16.mxu0 0
    %201 = vmatpush1.bf16.msra.mxu0 0
    %202 = vmatprep.mubr.bf16.mxu0 0
    %203 = vmatmul.mubr.bf16.gmra.mrb[0].mxu0 %v161
    %v204 = vpop.f32.mrb[0].mxu0
    %v205 = vadd.f32 %v139, %v204
    %v206 = vpop.f32.mrb[0].mxu0
    %v207 = vpop.f32.mrb[0].mxu0
    %v208 = vadd.f32 %v144, %v207
    %v209 = vpop.f32.mrb[0].mxu0
    %210 = vmatprep.mubr.bf16.mxu0 0
    %211 = vmatmul.mubr.bf16.gmra.mrb[0].mxu0 %v164
    %v212 = vpop.f32.mrb[0].mxu0
    %v213 = vadd.f32 %v149, %v212
    %v214 = vpop.f32.mrb[0].mxu0
    %v215 = vpop.f32.mrb[0].mxu0
    %v216 = vpop.f32.mrb[0].mxu0
    %217 = vdwg.mxu0
    %v218 = vtanh.pop %v205
    %v219 = vtanh.pop %v208
    %v220 = vtanh.pop %v213
    %v221 = vld [vmem:[%s5] sm:$0xf]
    %v222 = vld [vmem:[%s5 + $0x4] sm:$0xf]
    %v223 = vld [vmem:[%s5 + $0x8] sm:$0x1]
    %v224 = vpack.c.bf16 %v219, %v218
    %v225 = vpack.c.bf16 %v220, %v220
    %v226 = vld [vmem:[%s6] sm:$0xff]
    %v227 = vld [vmem:[%s6 + $0x8] sm:$0xff]
    %v228 = vld [vmem:[%s6 + $0x10] sm:$0x3]
    %230 = vset.pattern.permute.xlu0 0
    %231 = vperm.xlu0 %230, %v226
    %v232 = vpop.permute.xlu0 %231
    %235 = vset.pattern.permute.xlu0 0
    %236 = vperm.xlu0 %235, %v227
    %v237 = vpop.permute.xlu0 %236
    %240 = vset.pattern.permute.xlu0 0
    %241 = vperm.xlu0 %240, %v228
    %v242 = vpop.permute.xlu0 %241
    %v247 = vunpack.c.l.b16 %v221
    %v248 = vunpack.c.l.b16 %v222
    %v249 = vunpack.c.l.b16 %v223
    %v250 = vpack.c.b16 %v248, %v247
    %v251 = vpack.c.b16 %v249, %v249
    %v253 = vsel %vm159, %v250, 0
    %v256 = vsel %vm159, %v251, 0
    %v259 = vsel %vm166, %v225, 0
    %261 = vmatprep.subr.bf16.mxu0 0
    %262 = vmatpush1.bf16.msra.mxu0 %v224
    %263 = vmatprep.subr.bf16.mxu0 0
    %264 = vmatpush1.bf16.msra.mxu0 %v259
    %265 = vmatprep.subr.bf16.mxu0 0
    %266 = vmatpush1.bf16.msra.mxu0 0
    %267 = vmatprep.subr.bf16.mxu0 0
    %268 = vmatpush1.bf16.msra.mxu0 0
    %269 = vmatprep.subr.bf16.mxu0 0
    %270 = vmatpush1.bf16.msra.mxu0 0
    %271 = vmatprep.subr.bf16.mxu0 0
    %272 = vmatpush1.bf16.msra.mxu0 0
    %273 = vmatprep.subr.bf16.mxu0 0
    %274 = vmatpush1.bf16.msra.mxu0 0
    %275 = vmatprep.subr.bf16.mxu0 0
    %276 = vmatpush1.bf16.msra.mxu0 0
    %277 = vmatprep.subr.bf16.mxu0 0
    %278 = vmatpush1.bf16.msra.mxu0 0
    %279 = vmatprep.subr.bf16.mxu0 0
    %280 = vmatpush1.bf16.msra.mxu0 0
    %281 = vmatprep.subr.bf16.mxu0 0
    %282 = vmatpush1.bf16.msra.mxu0 0
    %283 = vmatprep.subr.bf16.mxu0 0
    %284 = vmatpush1.bf16.msra.mxu0 0
    %285 = vmatprep.subr.bf16.mxu0 0
    %286 = vmatpush1.bf16.msra.mxu0 0
    %287 = vmatprep.subr.bf16.mxu0 0
    %288 = vmatpush1.bf16.msra.mxu0 0
    %289 = vmatprep.subr.bf16.mxu0 0
    %290 = vmatpush1.bf16.msra.mxu0 0
    %291 = vmatprep.subr.bf16.mxu0 0
    %292 = vmatpush1.bf16.msra.mxu0 0
    %293 = vmatprep.mubr.bf16.mxu0 0
    %294 = vmatmul.mubr.bf16.gmra.mrb[0].mxu0 %v253
    %v295 = vpop.f32.mrb[0].mxu0
    %v296 = vadd.f32 %v232, %v295
    %v297 = vpop.f32.mrb[0].mxu0
    %v298 = vpop.f32.mrb[0].mxu0
    %v299 = vadd.f32 %v237, %v298
    %v300 = vpop.f32.mrb[0].mxu0
    %301 = vmatprep.mubr.bf16.mxu0 0
    %302 = vmatmul.mubr.bf16.gmra.mrb[0].mxu0 %v256
    %v303 = vpop.f32.mrb[0].mxu0
    %v304 = vadd.f32 %v242, %v303
    %v305 = vpop.f32.mrb[0].mxu0
    %v306 = vpop.f32.mrb[0].mxu0
    %v307 = vpop.f32.mrb[0].mxu0
    %308 = vdwg.mxu0
    %v309 = vtanh.pop %v296
    %v310 = vtanh.pop %v299
    %v311 = vtanh.pop %v304
    %v312 = vld [vmem:[%s7] sm:$0x1]
    %v313 = vpack.c.bf16 %v310, %v309
    %v314 = vpack.c.bf16 %v311, %v311
    %v315 = vld [vmem:[#allocation2] sm:$0x1]
    %317 = vset.pattern.permute.xlu0 0
    %318 = vperm.xlu0 %317, %v315
    %v319 = vpop.permute.xlu0 %318
    %v321 = vlaneseq
    %v322 = vshrl.u32 %v321, 7
    %v323 = vsub.s32 0, %v322
    %v324 = vrot.slane %v319, %v323
    %v326 = vsel %vm159, %v312, 0
    %v329 = vsel %vm166, %v314, 0
    %331 = vmatprep.subr.bf16.mxu0 0
    %332 = vmatpush1.bf16.msra.mxu0 %v313
    %333 = vmatprep.subr.bf16.mxu0 0
    %334 = vmatpush1.bf16.msra.mxu0 %v329
    %335 = vmatprep.subr.bf16.mxu0 0
    %336 = vmatpush1.bf16.msra.mxu0 0
    %337 = vmatprep.subr.bf16.mxu0 0
    %338 = vmatpush1.bf16.msra.mxu0 0
    %339 = vmatprep.subr.bf16.mxu0 0
    %340 = vmatpush1.bf16.msra.mxu0 0
    %341 = vmatprep.subr.bf16.mxu0 0
    %342 = vmatpush1.bf16.msra.mxu0 0
    %343 = vmatprep.subr.bf16.mxu0 0
    %344 = vmatpush1.bf16.msra.mxu0 0
    %345 = vmatprep.subr.bf16.mxu0 0
    %346 = vmatpush1.bf16.msra.mxu0 0
    %347 = vmatprep.subr.bf16.mxu0 0
    %348 = vmatpush1.bf16.msra.mxu0 0
    %349 = vmatprep.subr.bf16.mxu0 0
    %350 = vmatpush1.bf16.msra.mxu0 0
    %351 = vmatprep.subr.bf16.mxu0 0
    %352 = vmatpush1.bf16.msra.mxu0 0
    %353 = vmatprep.subr.bf16.mxu0 0
    %354 = vmatpush1.bf16.msra.mxu0 0
    %355 = vmatprep.subr.bf16.mxu0 0
    %356 = vmatpush1.bf16.msra.mxu0 0
    %357 = vmatprep.subr.bf16.mxu0 0
    %358 = vmatpush1.bf16.msra.mxu0 0
    %359 = vmatprep.subr.bf16.mxu0 0
    %360 = vmatpush1.bf16.msra.mxu0 0
    %361 = vmatprep.subr.bf16.mxu0 0
    %362 = vmatpush1.bf16.msra.mxu0 0
    %363 = vmatprep.mubr.bf16.mxu0 0
    %364 = vmatmul.mubr.bf16.gmra.mrb[0].mxu0 %v326
    %v365 = vpop.f32.mrb[0].mxu0
    %v366 = vadd.f32 %v324, %v365
    %v367 = vpop.f32.mrb[0].mxu0
    %v368 = vpop.f32.mrb[0].mxu0
    %v369 = vpop.f32.mrb[0].mxu0
    %370 = vdwg.mxu0
    %vm371 = vcmask 57344
    %372 = vst.msk [vmem:[#allocation3] sm:$0x1] %vm371, %v366
    // Predicated region
    $region38: #{neteq_forward.1} parent=1 // pred_check
      _
    $region39: #{neteq_forward.1} parent=1 // pred_check_branch
      %374 = sbr.rel (0) target = $region41
    $region40: #{neteq_forward.1} parent=1 // pred_region
      %s376 = ssub.s32 16, 16
      %377 = vsyncadd [#allocation4], %s376
      %s379 = sshll.u32 [#allocation3], 4
      %s380 = int_to_ptr.vmem [resolvable:$true] %s379
      %382 = dma.vmem_to_hbm [thread:$0]  %s380, 16, %s9, [#allocation4]
    $region41: #{neteq_forward.1} parent=1 // pred_fallthru
      _
    // Predicated region
    $region42: #{neteq_forward.1} parent=1 // pred_check
      _
    $region43: #{neteq_forward.1} parent=1 // pred_check_branch
      %384 = sbr.rel (0) target = $region45
    $region44: #{neteq_forward.1} parent=1 // pred_region
      %385 = dma.done [#allocation4], 16
    $region45: #{neteq_forward.1} parent=1 // pred_fallthru
      _
    %386 = vsyncpa [#allocation4], 1

</llo_original>
